<compile_context>
chip_gen: v5e
topology: v5e:2x2
jax: 0.10.0
libtpu: 0.0.40
codegen_flags: <defaults>
</compile_context>

<pallas_src>
import functools

import jax
import jax.numpy as jnp
from jax.experimental import pallas as pl
from jax.experimental.pallas import tpu as pltpu


def _flooding_ce_kernel(logits_ref, target_ref, out_ref,
                        m_ref, s_ref, p_ref, *,
                        n_total, tile_n, tile_c):
    i = pl.program_id(0)          # row tile   ("parallel")
    c = pl.program_id(1)          # class chunk ("arbitrary" / reduction)

    @pl.when(c == 0)
    def _():
        m_ref[...] = jnp.full_like(m_ref, -jnp.inf)
        s_ref[...] = jnp.zeros_like(s_ref)
        p_ref[...] = jnp.zeros_like(p_ref)

    chunk = logits_ref[...].astype(jnp.float32)            # (tile_n, tile_c)
    tgt = target_ref[...]                                   # (tile_n, 1) int32

    # Online (streaming) logsumexp over class chunks.
    m_prev = m_ref[...]
    m_new = jnp.maximum(m_prev, jnp.max(chunk, axis=-1, keepdims=True))
    s_ref[...] = (s_ref[...] * jnp.exp(m_prev - m_new)
                  + jnp.sum(jnp.exp(chunk - m_new), axis=-1, keepdims=True))
    m_ref[...] = m_new

    # Target-class logit gather via a lane-select (no one-hot f32 matmul).
    col = jax.lax.broadcasted_iota(jnp.int32, (tile_n, tile_c), 1) + c * tile_c
    p_ref[...] += jnp.sum(jnp.where(col == tgt, chunk, 0.0),
                          axis=-1, keepdims=True)

    @pl.when(c == pl.num_programs(1) - 1)
    def _():
        # Per-row NLL = logsumexp - picked.  Garbage rows of a padded last row
        # tile may be NaN/Inf; per-row reductions keep that confined to the
        # row and the valid-row select below discards it.
        per_row = m_ref[...] + jnp.log(s_ref[...]) - p_ref[...]
        if n_total % tile_n != 0:   # static: mask only when a partial tile exists
            row = jax.lax.broadcasted_iota(jnp.int32, (tile_n, 1), 0) + i * tile_n
            per_row = jnp.where(row < n_total, per_row, 0.0)
        part = jnp.sum(per_row)
        # Lane-dense (8,128) output block: partial sum at [0,0], zeros elsewhere;
        # the wrapper sums the whole output array.
        r = jax.lax.broadcasted_iota(jnp.int32, (8, 128), 0)
        l = jax.lax.broadcasted_iota(jnp.int32, (8, 128), 1)
        out_ref[0] = jnp.where((r == 0) & (l == 0), part, jnp.float32(0.0))


def _round_up(x, m):
    return (x + m - 1) // m * m


_MAX_TILE_C = 2048                       # lane chunk for class streaming
_VMEM_WORKSET_BYTES = 24 * 1024 * 1024   # fits v7x 64 MiB with headroom


def _choose_tiles(n, c, itemsize):
    if c <= _MAX_TILE_C:
        c_pad = _round_up(c, 128)
        tile_c = c_pad
    else:
        tile_c = _MAX_TILE_C
        c_pad = _round_up(c, tile_c)
    # Per-row VMEM cost: 2 double-buffered input chunks + ~4 full-chunk
    # f32/int32 elementwise temporaries (upcast, exp, iota, select).
    per_row = tile_c * (2 * itemsize + 4 * 4) + 64
    rows = int(_VMEM_WORKSET_BYTES // per_row)
    rows = max(16, min(rows, 8192))      # byte-capped, no small row cap
    if n <= rows:
        tile_n = n                       # block dim == full dim: always legal
    else:
        tile_n = (rows // 16) * 16       # multiple of 16: legal for f32 & bf16
    return tile_n, tile_c, c_pad


def flooding_cross_entropy(output, target, flooding_scalar=0.5,
                           tile_n=None, tile_c=None):
    """output: (N, C) float logits (f32/bf16); target: (N,) int class indices.

    Targets must be in [0, C); out-of-range targets are not clamped.
    """
    n, c = output.shape
    itemsize = jnp.dtype(output.dtype).itemsize

    auto_tn, auto_tc, c_pad = _choose_tiles(n, c, itemsize)
    if tile_c is None:
        tile_c = auto_tc
    else:
        tile_c = int(tile_c)
        c_pad = _round_up(c, tile_c)
    tile_n = int(auto_tn if tile_n is None else tile_n)

    if c_pad != c:
        # Pad classes to a lane-friendly multiple of tile_c with a very
        # negative *finite* value: exp() underflows to 0, it never wins the
        # row max, and it can never match a valid target index.
        fill = float(jnp.finfo(output.dtype).min)
        output = jnp.pad(output, ((0, 0), (0, c_pad - c)), constant_values=fill)

    target2d = target.astype(jnp.int32).reshape(n, 1)
    grid = (pl.cdiv(n, tile_n), c_pad // tile_c)

    cost = pl.CostEstimate(
        flops=int(6 * n * c_pad),
        transcendentals=int(n * c_pad + n),
        bytes_accessed=int(n * c_pad * itemsize + n * 4 + grid[0] * 8 * 128 * 4),
    )

    partials = pl.pallas_call(
        functools.partial(_flooding_ce_kernel,
                          n_total=n, tile_n=tile_n, tile_c=tile_c),
        out_shape=jax.ShapeDtypeStruct((grid[0], 8, 128), jnp.float32),
        grid_spec=pltpu.PrefetchScalarGridSpec(
            num_scalar_prefetch=0,
            grid=grid,
            in_specs=[
                pl.BlockSpec((tile_n, tile_c), lambda i, cc: (i, cc)),  # logits
                pl.BlockSpec((tile_n, 1), lambda i, cc: (i, 0)),        # targets
            ],
            out_specs=pl.BlockSpec((1, 8, 128), lambda i, cc: (i, 0, 0)),
            scratch_shapes=[pltpu.VMEM((tile_n, 1), jnp.float32),   # running max
                            pltpu.VMEM((tile_n, 1), jnp.float32),   # running sum-exp
                            pltpu.VMEM((tile_n, 1), jnp.float32)],  # picked logit
        ),
        compiler_params=pltpu.CompilerParams(
            dimension_semantics=("parallel", "arbitrary"),
            vmem_limit_bytes=48 * 1024 * 1024,
        ),
        cost_estimate=cost,
    )(output, target2d)          # no wrapper-side astype: bf16 streamed as-is

    # Finalize in the wrapper: global mean + flooding trick.
    ce = jnp.sum(partials) / jnp.float32(n)
    b = jnp.float32(flooding_scalar)
    return jnp.abs(ce - b) + b


def _reference(output, target, flooding_scalar=0.5):
    # Pure-JAX reference (F.cross_entropy mean + flooding).
    logp = jax.nn.log_softmax(output.astype(jnp.float32), axis=-1)
    nll = -jnp.take_along_axis(logp, target[:, None].astype(jnp.int32), axis=-1)
    ce = jnp.mean(nll)
    b = jnp.float32(flooding_scalar)
    return jnp.abs(ce - b) + b


if __name__ == "__main__":
    key = jax.random.PRNGKey(0)
    k1, k2, k3, k4 = jax.random.split(key, 4)

    # 1) Small classification head: batch=8, classes=32, f32 logits.
    #    Classes are lane-padded 32->128 in the wrapper; single-tile grid.
    N, C = 8, 32
    logits = jax.random.normal(k1, (N, C), dtype=jnp.float32)
    target = jax.random.randint(k2, (N,), 0, C, dtype=jnp.int32)
    got = jax.block_until_ready(flooding_cross_entropy(logits, target, 0.5))
    want = _reference(logits, target, 0.5)
    assert jnp.allclose(got, want, rtol=1e-5, atol=1e-5), (got, want)

    # 2) bf16 logits, multi-tile grid on both axes + masked remainder rows:
    #    N=24 with tile_n=16 -> 2 row tiles (last has 8 padded rows);
    #    C=256 with tile_c=128 -> 2 class chunks (online-logsumexp path).
    N2, C2 = 24, 256
    logits2 = jax.random.normal(k3, (N2, C2), dtype=jnp.bfloat16)
    target2 = jax.random.randint(k4, (N2,), 0, C2, dtype=jnp.int32)
    got2 = jax.block_until_ready(
        flooding_cross_entropy(logits2, target2, 0.5, tile_n=16, tile_c=128))
    want2 = _reference(logits2, target2, 0.5)
    assert jnp.allclose(got2, want2, rtol=1e-4, atol=1e-4), (got2, want2)

    print("KERNEL_OK")
</pallas_src>

<mosaic_0001>
module attributes {stable_mosaic.version = 11 : i64} {
  func.func @_flooding_ce_kernel(%arg0: i32, %arg1: i32, %arg2: memref<8x128xf32, #tpu.memory_space<vmem>>, %arg3: memref<8x1xi32, #tpu.memory_space<vmem>>, %arg4: memref<1x8x128xf32, #tpu.memory_space<vmem>>, %arg5: memref<8x1xf32, #tpu.memory_space<vmem>>, %arg6: memref<8x1xf32, #tpu.memory_space<vmem>>, %arg7: memref<8x1xf32, #tpu.memory_space<vmem>>) attributes {dimension_semantics = [#tpu.dimension_semantics<parallel>, #tpu.dimension_semantics<arbitrary>], iteration_bounds = array<i64: 1, 1>, scalar_prefetch = 0 : i64, scratch_operands = 3 : i64, tpu.core_type = #tpu.core_type<tc>, window_params = [{transform_indices = @transform_0, window_bounds = array<i64: 8, 128>}, {transform_indices = @transform_1, window_bounds = array<i64: 8, 1>}, {transform_indices = @transform_2, window_bounds = array<i64: 1, 8, 128>}]} {
    %c0_i32 = arith.constant 0 : i32
    %0 = arith.cmpi eq, %arg1, %c0_i32 : i32
    %1 = arith.extui %0 : i1 to i32
    %c0_i32_0 = arith.constant 0 : i32
    %2 = arith.cmpi ne, %1, %c0_i32_0 : i32
    scf.if %2 {
      %cst_21 = arith.constant 0xFF800000 : f32
      %37 = vector.broadcast %cst_21 : f32 to vector<8x1xf32>
      %c0_22 = arith.constant 0 : index
      %c0_23 = arith.constant 0 : index
      %38 = vector.load %arg5[%c0_22, %c0_23] : memref<8x1xf32, #tpu.memory_space<vmem>>, vector<8x1xf32>
      tpu.vector_store %arg5[%c0_22, %c0_23], %37 {strides = array<i32>} : memref<8x1xf32, #tpu.memory_space<vmem>>, vector<8x1xf32>,
      %cst_24 = arith.constant 0.000000e+00 : f32
      %39 = vector.broadcast %cst_24 : f32 to vector<8x1xf32>
      %c0_25 = arith.constant 0 : index
      %c0_26 = arith.constant 0 : index
      %40 = vector.load %arg6[%c0_25, %c0_26] : memref<8x1xf32, #tpu.memory_space<vmem>>, vector<8x1xf32>
      tpu.vector_store %arg6[%c0_25, %c0_26], %39 {strides = array<i32>} : memref<8x1xf32, #tpu.memory_space<vmem>>, vector<8x1xf32>,
      %cst_27 = arith.constant 0.000000e+00 : f32
      %41 = vector.broadcast %cst_27 : f32 to vector<8x1xf32>
      %c0_28 = arith.constant 0 : index
      %c0_29 = arith.constant 0 : index
      %42 = vector.load %arg7[%c0_28, %c0_29] : memref<8x1xf32, #tpu.memory_space<vmem>>, vector<8x1xf32>
      tpu.vector_store %arg7[%c0_28, %c0_29], %41 {strides = array<i32>} : memref<8x1xf32, #tpu.memory_space<vmem>>, vector<8x1xf32>,
    } else {
    }
    %c0 = arith.constant 0 : index
    %c0_1 = arith.constant 0 : index
    %3 = vector.load %arg2[%c0, %c0_1] : memref<8x128xf32, #tpu.memory_space<vmem>>, vector<8x128xf32>
    %c0_2 = arith.constant 0 : index
    %c0_3 = arith.constant 0 : index
    %4 = vector.load %arg3[%c0_2, %c0_3] : memref<8x1xi32, #tpu.memory_space<vmem>>, vector<8x1xi32>
    %c0_4 = arith.constant 0 : index
    %c0_5 = arith.constant 0 : index
    %5 = vector.load %arg5[%c0_4, %c0_5] : memref<8x1xf32, #tpu.memory_space<vmem>>, vector<8x1xf32>
    %cst = arith.constant dense<0xFF800000> : vector<8xf32>
    %6 = vector.multi_reduction <maximumf>, %3, %cst [1] : vector<8x128xf32> to vector<8xf32>
    %7 = vector.shape_cast %6 : vector<8xf32> to vector<8x1xf32>
    %8 = arith.maximumf %5, %7 : vector<8x1xf32>
    %c0_6 = arith.constant 0 : index
    %c0_7 = arith.constant 0 : index
    %9 = vector.load %arg6[%c0_6, %c0_7] : memref<8x1xf32, #tpu.memory_space<vmem>>, vector<8x1xf32>
    %10 = arith.subf %5, %8 : vector<8x1xf32>
    %11 = math.exp %10 : vector<8x1xf32>
    %12 = arith.mulf %9, %11 : vector<8x1xf32>
    %13 = vector.broadcast %8 : vector<8x1xf32> to vector<8x128xf32>
    %14 = arith.subf %3, %13 : vector<8x128xf32>
    %15 = math.exp %14 : vector<8x128xf32>
    %cst_8 = arith.constant dense<0.000000e+00> : vector<8xf32>
    %16 = vector.multi_reduction <add>, %15, %cst_8 [1] : vector<8x128xf32> to vector<8xf32>
    %17 = vector.shape_cast %16 : vector<8xf32> to vector<8x1xf32>
    %18 = arith.addf %12, %17 : vector<8x1xf32>
    %c0_9 = arith.constant 0 : index
    %c0_10 = arith.constant 0 : index
    %19 = vector.load %arg6[%c0_9, %c0_10] : memref<8x1xf32, #tpu.memory_space<vmem>>, vector<8x1xf32>
    tpu.vector_store %arg6[%c0_9, %c0_10], %18 {strides = array<i32>} : memref<8x1xf32, #tpu.memory_space<vmem>>, vector<8x1xf32>,
    %c0_11 = arith.constant 0 : index
    %c0_12 = arith.constant 0 : index
    %20 = vector.load %arg5[%c0_11, %c0_12] : memref<8x1xf32, #tpu.memory_space<vmem>>, vector<8x1xf32>
    tpu.vector_store %arg5[%c0_11, %c0_12], %8 {strides = array<i32>} : memref<8x1xf32, #tpu.memory_space<vmem>>, vector<8x1xf32>,
    %21 = tpu.iota {dimensions = array<i32: 1>} : vector<8x128xi32>
    %c128_i32 = arith.constant 128 : i32
    %22 = arith.muli %arg1, %c128_i32 : i32
    %23 = vector.broadcast %22 : i32 to vector<8x128xi32>
    %24 = arith.addi %21, %23 : vector<8x128xi32>
    %c0_13 = arith.constant 0 : index
    %c0_14 = arith.constant 0 : index
    %25 = vector.load %arg7[%c0_13, %c0_14] : memref<8x1xf32, #tpu.memory_space<vmem>>, vector<8x1xf32>
    %26 = vector.broadcast %4 : vector<8x1xi32> to vector<8x128xi32>
    %27 = arith.cmpi eq, %24, %26 : vector<8x128xi32>
    %cst_15 = arith.constant 0.000000e+00 : f32
    %28 = vector.broadcast %cst_15 : f32 to vector<8x128xf32>
    %29 = arith.select %27, %3, %28 : vector<8x128xi1>, vector<8x128xf32>
    %cst_16 = arith.constant dense<0.000000e+00> : vector<8xf32>
    %30 = vector.multi_reduction <add>, %29, %cst_16 [1] : vector<8x128xf32> to vector<8xf32>
    %31 = vector.shape_cast %30 : vector<8xf32> to vector<8x1xf32>
    %32 = arith.addf %25, %31 : vector<8x1xf32>
    %c0_17 = arith.constant 0 : index
    %c0_18 = arith.constant 0 : index
    %33 = vector.load %arg7[%c0_17, %c0_18] : memref<8x1xf32, #tpu.memory_space<vmem>>, vector<8x1xf32>
    tpu.vector_store %arg7[%c0_17, %c0_18], %32 {strides = array<i32>} : memref<8x1xf32, #tpu.memory_space<vmem>>, vector<8x1xf32>,
    %c0_i32_19 = arith.constant 0 : i32
    %34 = arith.cmpi eq, %arg1, %c0_i32_19 : i32
    %35 = arith.extui %34 : i1 to i32
    %c0_i32_20 = arith.constant 0 : i32
    %36 = arith.cmpi ne, %35, %c0_i32_20 : i32
    scf.if %36 {
      %c0_21 = arith.constant 0 : index
      %c0_22 = arith.constant 0 : index
      %37 = vector.load %arg5[%c0_21, %c0_22] : memref<8x1xf32, #tpu.memory_space<vmem>>, vector<8x1xf32>
      %c0_23 = arith.constant 0 : index
      %c0_24 = arith.constant 0 : index
      %38 = vector.load %arg6[%c0_23, %c0_24] : memref<8x1xf32, #tpu.memory_space<vmem>>, vector<8x1xf32>
      %39 = math.log %38 : vector<8x1xf32>
      %40 = arith.addf %37, %39 : vector<8x1xf32>
      %c0_25 = arith.constant 0 : index
      %c0_26 = arith.constant 0 : index
      %41 = vector.load %arg7[%c0_25, %c0_26] : memref<8x1xf32, #tpu.memory_space<vmem>>, vector<8x1xf32>
      %42 = arith.subf %40, %41 : vector<8x1xf32>
      %43 = vector.shape_cast %42 : vector<8x1xf32> to vector<1x8x1xf32>
      %cst_27 = arith.constant dense<0.000000e+00> : vector<1xf32>
      %44 = vector.multi_reduction <add>, %43, %cst_27 [1, 2] : vector<1x8x1xf32> to vector<1xf32>
      %45 = vector.shape_cast %44 : vector<1xf32> to vector<1x1x1xf32>
      %46 = vector.extract %45[0, 0, 0] : f32 from vector<1x1x1xf32>
      %47 = tpu.iota {dimensions = array<i32: 0>} : vector<8x128xi32>
      %48 = tpu.iota {dimensions = array<i32: 1>} : vector<8x128xi32>
      %c0_i32_28 = arith.constant 0 : i32
      %49 = vector.broadcast %c0_i32_28 : i32 to vector<8x128xi32>
      %50 = arith.cmpi eq, %47, %49 : vector<8x128xi32>
      %c0_i32_29 = arith.constant 0 : i32
      %51 = vector.broadcast %c0_i32_29 : i32 to vector<8x128xi32>
      %52 = arith.cmpi eq, %48, %51 : vector<8x128xi32>
      %53 = arith.andi %50, %52 : vector<8x128xi1>
      %cst_30 = arith.constant 0.000000e+00 : f32
      %54 = vector.broadcast %46 : f32 to vector<8x128xf32>
      %55 = vector.broadcast %cst_30 : f32 to vector<8x128xf32>
      %56 = arith.select %53, %54, %55 : vector<8x128xi1>, vector<8x128xf32>
      %c0_31 = arith.constant 0 : index
      %c0_32 = arith.constant 0 : index
      %c0_33 = arith.constant 0 : index
      %57 = vector.load %arg4[%c0_31, %c0_32, %c0_33] : memref<1x8x128xf32, #tpu.memory_space<vmem>>, vector<1x8x128xf32>
      %58 = vector.shape_cast %57 : vector<1x8x128xf32> to vector<8x128xf32>
      %59 = vector.shape_cast %56 : vector<8x128xf32> to vector<1x8x128xf32>
      tpu.vector_store %arg4[%c0_31, %c0_32, %c0_33], %59 {strides = array<i32>} : memref<1x8x128xf32, #tpu.memory_space<vmem>>, vector<1x8x128xf32>,
    } else {
    }
    return
  }
  func.func @transform_0(%arg0: i32, %arg1: i32) -> (i32, i32) {
    %c0_i32 = arith.constant 0 : i32
    return %arg0, %arg1 : i32, i32
  }
  func.func @transform_1(%arg0: i32, %arg1: i32) -> (i32, i32) {
    %c0_i32 = arith.constant 0 : i32
    %c0_i32_0 = arith.constant 0 : i32
    return %arg0, %c0_i32 : i32, i32
  }
  func.func @transform_2(%arg0: i32, %arg1: i32) -> (i32, i32, i32) {
    %c0_i32 = arith.constant 0 : i32
    %c0_i32_0 = arith.constant 0 : i32
    %c0_i32_1 = arith.constant 0 : i32
    return %arg0, %c0_i32, %c0_i32_0 : i32, i32, i32
  }
}

</mosaic_0001>

<llo_original>
// kernel: tpu_custom_call.1
$region0: #{tpu_custom_call.1}
  #allocation0 [shape = 'u32[]', space=smem, size = 0x4, offset = 0x4, fixed_abs, tag = 'smem constant byte address 0x4 - core index']
  #allocation1 [shape = 'u32[72,128]{1,0:T(1,128)}', space=vmem, size = 0x9000, scoped, tag = 'internal scratch']
  #allocation2 [shape = 'f32[8,1]{1,0:T(8,128)}', space=vmem, size = 0x1000, scoped, tag = 'scratch operand']
  #allocation3 [shape = 'f32[8,1]{1,0:T(8,128)}', space=vmem, size = 0x1000, scoped, tag = 'scratch operand']
  #allocation4 [shape = 'f32[8,1]{1,0:T(8,128)}', space=vmem, size = 0x1000, scoped, tag = 'scratch operand']
  %s0 = inlined_call_operand.vmem [shape: f32[8,128], index: 0, kind: input, shape index: {}]
  %s1 = inlined_call_operand.vmem [shape: s32[8,1], index: 1, kind: input, shape index: {}]
  %s2 = inlined_call_operand.hbm [shape: f32[1,8,128], index: 2, kind: output, shape index: {}]
  %s3 = sld [smem:[#allocation0]]
  $region26: #{tpu_custom_call.1} parent=0
    _
  %s5 = ssub.s32 1, %s3
  %s6 = scalar_select 0, %s5, %s3
  $region1: #{tpu_custom_call.1} parent=0
    #allocation5 [shape = 'u8[4096]{0}', space=vmem, size = 0x1000, scoped, tag = 'output window, operand 0, single buffered']
    #allocation6 [shape = 's32[1]{0}', space=sflag, size = 0x4, scoped, tag = 'scoped memory for tpu_custom_call.1']
    %7 = vsyncpa [#allocation6], 0
    // Predicated region
    $region2: #{tpu_custom_call.1} parent=1 // pred_check
      _
    $region3: #{tpu_custom_call.1} parent=1 // pred_check_branch
      %9 = sbr.rel (0) target = $region5
    $region4: #{tpu_custom_call.1} parent=1 // pred_region
      _
    $region5: #{tpu_custom_call.1} parent=1 // pred_fallthru
      _
    // Predicated region
    $region6: #{tpu_custom_call.1} parent=1 // pred_check
      _
    $region7: #{tpu_custom_call.1} parent=1 // pred_check_branch
      %11 = sbr.rel (0) target = $region9
    $region8: #{tpu_custom_call.1} parent=1 // pred_region
      _
    $region9: #{tpu_custom_call.1} parent=1 // pred_fallthru
      _
    %p12 = scmp.eq.s32.totalorder 0, 0
    // Predicated region
    $region10: #{tpu_custom_call.1} parent=1 // pred_check
      %p13 = pneg %p12
    $region11: #{tpu_custom_call.1} parent=1 // pred_check_branch
      %15 = sbr.rel (%p13) target = $region13
    $region12: #{tpu_custom_call.1} parent=1 // pred_region
      %vm16 = vcmask 7168
      %17 = vst.msk [vmem:[#allocation2] sm:$0xff] %vm16, -inf
      %18 = vst.msk [vmem:[#allocation3] sm:$0xff] %vm16, 0.0
      %19 = vst.msk [vmem:[#allocation4] sm:$0xff] %vm16, 0.0
    $region13: #{tpu_custom_call.1} parent=1 // pred_fallthru
      _
    %v20 = vld [vmem:[%s0] sm:$0xff]
    %v21 = vld [vmem:[%s1] sm:$0xff]
    %v22 = vld [vmem:[#allocation2] sm:$0xff]
    %23 = vmax.xlane.f32.xlu0 %v20
    %v24 = vpop.xlane.xlu0 %23
    %v25 = vmax.f32 %v22, %v24
    %v26 = vld [vmem:[#allocation3] sm:$0xff]
    %v27 = vsub.f32 %v22, %v25
    %v28 = vmul.f32 %v27, 1.442695
    %v29 = vpow.pop %v28
    %v30 = vmul.f32 %v26, %v29
    %32 = vset.pattern.permute.xlu0 0
    %33 = vperm.xlu0 %32, %v25
    %v34 = vpop.permute.xlu0 %33
    %v36 = vsub.f32 %v20, %v34
    %v37 = vmul.f32 %v36, 1.442695
    %v38 = vpow.pop %v37
    %39 = vadd.xlane.f32.xlu0 %v38
    %v40 = vpop.xlane.xlu0 %39
    %v41 = vadd.f32 %v30, %v40
    %vm42 = vcmask 7168
    %43 = vst.msk [vmem:[#allocation3] sm:$0xff] %vm42, %v41
    %44 = vst.msk [vmem:[#allocation2] sm:$0xff] %vm42, %v25
    %v45 = vlaneseq
    %v46 = vand.u32 %v45, 127
    %s47 = smul.u32 0, 128
    %v48 = vstv %s47
    %v49 = vadd.s32 %v46, %v48
    %v50 = vld [vmem:[#allocation4] sm:$0xff]
    %51 = vset.pattern.permute.xlu0 0
    %52 = vperm.xlu0 %51, %v21
    %v53 = vpop.permute.xlu0 %52
    %vm54 = vcmp.eq.s32.totalorder %v49, %v53
    %v55 = vsel %vm54, %v20, 0.0
    %56 = vadd.xlane.f32.xlu0 %v55
    %v57 = vpop.xlane.xlu0 %56
    %v58 = vadd.f32 %v50, %v57
    %59 = vst.msk [vmem:[#allocation4] sm:$0xff] %vm42, %v58
    // Predicated region
    $region14: #{tpu_custom_call.1} parent=1 // pred_check
      %p60 = pneg %p12
    $region15: #{tpu_custom_call.1} parent=1 // pred_check_branch
      %62 = sbr.rel (%p60) target = $region17
    $region16: #{tpu_custom_call.1} parent=1 // pred_region
      %v63 = vld [vmem:[#allocation2] sm:$0xff]
      %v64 = vld [vmem:[#allocation3] sm:$0xff]
      %v65 = vlog2.pop %v64
      %v66 = vmul.f32 %v65, 0.6931472
      %v67 = vadd.f32 %v63, %v66
      %v68 = vld [vmem:[#allocation4] sm:$0xff]
      %v69 = vsub.f32 %v67, %v68
      %v70 = vsel %vm42, %v69, 0.0
      %71 = vadd.xlane.f32.xlu0 %v70
      %v72 = vpop.xlane.xlu0 %71
      %v73 = vrot.slane %v72, 4
      %v74 = vadd.f32 %v72, %v73
      %v75 = vrot.slane %v74, 2
      %v76 = vadd.f32 %v74, %v75
      %v77 = vrot.slane %v76, 1
      %v78 = vadd.f32 %v76, %v77
      %s79 = vtos %v78
      %v80 = vlaneseq
      %v81 = vshrl.u32 %v80, 7
      %vm82 = vcmp.eq.s32.totalorder %v81, 0
      %vm83 = vcmp.eq.s32.totalorder %v46, 0
      %vm84 = vmand %vm82, %vm83
      %v85 = vstv %s79
      %v86 = vsel %vm84, %v85, 0.0
      %87 = vst [vmem:[#allocation5] sm:$0xff] %v86
    $region17: #{tpu_custom_call.1} parent=1 // pred_fallthru
      _
    // Predicated region
    $region18: #{tpu_custom_call.1} parent=1 // pred_check
      _
    $region19: #{tpu_custom_call.1} parent=1 // pred_check_branch
      %89 = sbr.rel (0) target = $region21
    $region20: #{tpu_custom_call.1} parent=1 // pred_region
      %91 = vsyncadd [#allocation6], 0
      %s93 = sshll.u32 [#allocation5], 4
      %s94 = int_to_ptr.vmem [resolvable:$true] %s93
      %s95 = sshll.u32 %s2, 4
      %s96 = int_to_ptr.hbm [resolvable:$true] %s95
      %98 = dma.vmem_to_hbm [thread:$0]  %s94, 128, %s96, [#allocation6]
    $region21: #{tpu_custom_call.1} parent=1 // pred_fallthru
      _
    // Predicated region
    $region22: #{tpu_custom_call.1} parent=1 // pred_check
      _
    $region23: #{tpu_custom_call.1} parent=1 // pred_check_branch
      %100 = sbr.rel (0) target = $region25
    $region24: #{tpu_custom_call.1} parent=1 // pred_region
      %102 = dma.done [#allocation6], 128
    $region25: #{tpu_custom_call.1} parent=1 // pred_fallthru
      _
    %103 = vsyncpa [#allocation6], 1

</llo_original>
